<compile_context>
chip_gen: v7x
topology: tpu7x:2x2x1
jax: 0.10.0
libtpu: 0.0.40
codegen_flags: <defaults>
</compile_context>

<pallas_src>
import functools

import jax
import jax.numpy as jnp
import numpy as np
from jax.experimental import pallas as pl
from jax.experimental.pallas import tpu as pltpu


def _cnn_feed_kernel(x_ref, w1_ref, b1_ref, w2_ref, b2_ref, g_ref, beta_ref,
                     out_ref, acc_ref, *, eps):
    k = pl.program_id(1)
    n_k = pl.num_programs(1)

    x = x_ref[...]                                      # [tm, d_in], input dtype

    @pl.when(k == 0)
    def _():
        # Residual + second-conv bias, accumulated once, in f32.
        acc_ref[...] = x.astype(jnp.float32) + b2_ref[...].astype(jnp.float32)

    # h_k = relu(x @ W1[:, k-chunk] + b1[k-chunk]).
    # Operands are fed at the weight dtype (bf16 by default -> full-rate MXU
    # on v5e/v6e/v7x); accumulation stays f32.
    h = jnp.dot(x.astype(w1_ref.dtype), w1_ref[...],
                preferred_element_type=jnp.float32)
    h = jnp.maximum(h + b1_ref[...].astype(jnp.float32), 0.0)

    # y += h_k @ W2[k-chunk, :]
    acc_ref[...] += jnp.dot(h.astype(w2_ref.dtype), w2_ref[...],
                            preferred_element_type=jnp.float32)

    @pl.when(k == n_k - 1)
    def _():
        y = acc_ref[...]                                # [tm, d_in] f32
        d = y.shape[-1]
        # One-pass LayerNorm statistics (single XLU reduction pair).
        s = jnp.sum(y, axis=-1, keepdims=True)
        ss = jnp.sum(y * y, axis=-1, keepdims=True)
        mean = s * (1.0 / d)
        var = ss * (1.0 / d) - mean * mean
        inv = jax.lax.rsqrt(var + eps)                  # EUP slot, VALU stays free
        out = (y - mean) * inv * g_ref[...].astype(jnp.float32) \
              + beta_ref[...].astype(jnp.float32)
        out_ref[...] = out.astype(out_ref.dtype)


def _round_up(x, m):
    return ((x + m - 1) // m) * m


def _pick_dhid_chunk(d_hid, max_chunk):
    """Largest multiple-of-128 divisor of d_hid that is <= max_chunk."""
    if d_hid <= max_chunk:
        return d_hid
    start = (max_chunk // 128) * 128
    for c in range(start, 127, -128):
        if d_hid % c == 0:
            return c
    return d_hid  # no nice divisor: fall back to a single chunk


def cnn_feed(x, w1, b1, w2, b2, gamma, beta, *, eps=1e-5, block_m=512,
             dhid_chunk=2048, compute_dtype=jnp.bfloat16):
    """Pallas CNNFeed forward (eval mode).

    x:     [B, L, d_in]
    w1:    [d_in, d_hid]   (= torch w_1.weight[:, :, 0].T)
    b1:    [d_hid]
    w2:    [d_hid, d_in]   (= torch w_2.weight[:, :, 0].T)
    b2:    [d_in]
    gamma: [d_in]          LayerNorm weight
    beta:  [d_in]          LayerNorm bias
    compute_dtype: MXU feed dtype for x/W1/h/W2 (bf16 default; accumulation f32).
    returns [B, L, d_in] in x.dtype
    """
    B, L, d_in = x.shape
    d_hid = w1.shape[1]
    assert w1.shape == (d_in, d_hid)
    assert w2.shape == (d_hid, d_in)
    assert b1.shape == (d_hid,) and b2.shape == (d_in,)
    assert gamma.shape == (d_in,) and beta.shape == (d_in,)
    # NOTE: for best MXU utilisation keep d_in / d_hid multiples of 128
    # (256 preferred on v6e/v7x); ragged feature dims still work via the
    # "block == full dim" rule but waste MXU columns.

    M = B * L
    xm = x.reshape(M, d_in)                      # contiguous -> free reshape

    # Token tile: multiple of 8 (sublane), large enough to amortize the
    # ~0.35us per-grid-step overhead, but capped so there are >= 2 "parallel"
    # steps (both v7x TensorCores get work).
    tm = min(block_m, _round_up(M, 8))
    if M > 8 and pl.cdiv(M, tm) < 2:
        tm = _round_up(pl.cdiv(M, 2), 8)
    n_m = pl.cdiv(M, tm)                         # ragged last block handled by Pallas

    # d_hid reduction chunk (streams W1/W2, bounds the h intermediate).
    ck = _pick_dhid_chunk(d_hid, dhid_chunk)
    n_k = d_hid // ck

    # Weights fed to the MXU in compute_dtype (bf16 by default: full-rate MXU,
    # half the resident-weight VMEM).
    w1c = w1.astype(compute_dtype)
    w2c = w2.astype(compute_dtype)

    # 2-D views of the small parameter vectors (lane axis last).
    b1_2d = b1.reshape(1, d_hid)
    b2_2d = b2.reshape(1, d_in)
    g_2d = gamma.reshape(1, d_in)
    beta_2d = beta.reshape(1, d_in)

    # ---- VMEM budget: double-buffered weight chunks + io tiles + acc + h ----
    cbytes = jnp.dtype(compute_dtype).itemsize
    xbytes = x.dtype.itemsize
    need = (2 * 2 * d_in * ck * cbytes            # W1 + W2 chunks, double-buffered
            + 2 * tm * d_in * 2 * xbytes          # x tile + out tile, double-buffered
            + tm * d_in * 4                       # f32 accumulator scratch
            + 2 * tm * ck * 4                     # h intermediate + slack
            + 4 * (ck + 3 * d_in) * 4)            # biases / gamma / beta
    try:
        phys_vmem = pltpu.get_tpu_info().vmem_capacity_bytes
    except Exception:                             # pragma: no cover - fallback
        phys_vmem = 64 * 1024 * 1024              # conservative (v7x per-TC)
    vmem_limit = int(min(phys_vmem * 3 // 4,
                         max(int(need * 1.4), 32 * 1024 * 1024)))

    flops = 4 * M * d_in * d_hid                  # two matmuls, 2 flops/MAC
    bytes_accessed = (2 * M * d_in * xbytes       # x in + out
                      + 2 * d_in * d_hid * cbytes # W1 + W2
                      + (d_hid + 3 * d_in) * 4)   # biases / gamma / beta

    kernel = functools.partial(_cnn_feed_kernel, eps=float(eps))

    out = pl.pallas_call(
        kernel,
        out_shape=jax.ShapeDtypeStruct((M, d_in), x.dtype),
        grid=(n_m, n_k),                          # token tiles x d_hid chunks (reduction last)
        in_specs=[
            pl.BlockSpec((tm, d_in), lambda i, k: (i, 0)),     # x tile (pipelined)
            pl.BlockSpec((d_in, ck), lambda i, k: (0, k)),     # W1 chunk
            pl.BlockSpec((1, ck), lambda i, k: (0, k)),        # b1 chunk
            pl.BlockSpec((ck, d_in), lambda i, k: (k, 0)),     # W2 chunk
            pl.BlockSpec((1, d_in), lambda i, k: (0, 0)),      # b2
            pl.BlockSpec((1, d_in), lambda i, k: (0, 0)),      # gamma
            pl.BlockSpec((1, d_in), lambda i, k: (0, 0)),      # beta
        ],
        out_specs=pl.BlockSpec((tm, d_in), lambda i, k: (i, 0)),
        scratch_shapes=[pltpu.VMEM((tm, d_in), jnp.float32)],  # y accumulator
        compiler_params=pltpu.CompilerParams(
            dimension_semantics=("parallel", "arbitrary"),
            vmem_limit_bytes=vmem_limit,
        ),
        cost_estimate=pl.CostEstimate(flops=flops,
                                      transcendentals=0,
                                      bytes_accessed=bytes_accessed),
    )(xm, w1c, b1_2d, w2c, b2_2d, g_2d, beta_2d)

    return out.reshape(B, L, d_in)


def _reference(x, w1, b1, w2, b2, gamma, beta, eps=1e-5):
    hp = jax.lax.Precision.HIGHEST
    h = jnp.maximum(jnp.einsum("bld,dh->blh", x, w1, precision=hp) + b1, 0.0)
    y = jnp.einsum("blh,hd->bld", h, w2, precision=hp) + b2
    z = y + x
    mean = jnp.mean(z, axis=-1, keepdims=True)
    var = jnp.mean((z - mean) ** 2, axis=-1, keepdims=True)
    return (z - mean) * jax.lax.rsqrt(var + eps) * gamma + beta


if __name__ == "__main__":
    key = jax.random.PRNGKey(0)
    d_in, d_hid = 128, 256            # small but lane-aligned (MXU-friendly)
    kx, kw1, kb1, kw2, kb2, kg, kb, kx2 = jax.random.split(key, 8)

    w1 = jax.random.normal(kw1, (d_in, d_hid), dtype=jnp.float32) * 0.1
    b1 = jax.random.normal(kb1, (d_hid,), dtype=jnp.float32) * 0.1
    w2 = jax.random.normal(kw2, (d_hid, d_in), dtype=jnp.float32) * 0.1
    b2 = jax.random.normal(kb2, (d_in,), dtype=jnp.float32) * 0.1
    gamma = 1.0 + 0.1 * jax.random.normal(kg, (d_in,), dtype=jnp.float32)
    beta = 0.1 * jax.random.normal(kb, (d_in,), dtype=jnp.float32)

    # Case 1: aligned batch, exact f32 compute path.
    x = jax.random.normal(kx, (2, 8, d_in), dtype=jnp.float32)
    out = jax.block_until_ready(
        cnn_feed(x, w1, b1, w2, b2, gamma, beta, compute_dtype=jnp.float32))
    np.testing.assert_allclose(np.asarray(out),
                               np.asarray(_reference(x, w1, b1, w2, b2, gamma, beta)),
                               atol=2e-5, rtol=2e-5)

    # Case 2: ragged token count + chunked d_hid reduction axis, f32 path.
    x2 = jax.random.normal(kx2, (2, 9, d_in), dtype=jnp.float32)
    out2 = jax.block_until_ready(
        cnn_feed(x2, w1, b1, w2, b2, gamma, beta,
                 compute_dtype=jnp.float32, dhid_chunk=128))
    np.testing.assert_allclose(np.asarray(out2),
                               np.asarray(_reference(x2, w1, b1, w2, b2, gamma, beta)),
                               atol=2e-5, rtol=2e-5)

    # Case 3: default bf16 MXU-rate path (mixed precision -> relaxed tolerance).
    out3 = jax.block_until_ready(cnn_feed(x, w1, b1, w2, b2, gamma, beta))
    np.testing.assert_allclose(np.asarray(out3),
                               np.asarray(_reference(x, w1, b1, w2, b2, gamma, beta)),
                               atol=1e-1, rtol=1e-1)

    print("KERNEL_OK")
</pallas_src>

<mosaic_0001>
module attributes {stable_mosaic.version = 11 : i64} {
  func.func @_cnn_feed_kernel(%arg0: i32, %arg1: i32, %arg2: memref<8x128xf32, #tpu.memory_space<vmem>>, %arg3: memref<128x256xf32, #tpu.memory_space<vmem>>, %arg4: memref<1x256xf32, #tpu.memory_space<vmem>>, %arg5: memref<256x128xf32, #tpu.memory_space<vmem>>, %arg6: memref<1x128xf32, #tpu.memory_space<vmem>>, %arg7: memref<1x128xf32, #tpu.memory_space<vmem>>, %arg8: memref<1x128xf32, #tpu.memory_space<vmem>>, %arg9: memref<8x128xf32, #tpu.memory_space<vmem>>, %arg10: memref<8x128xf32, #tpu.memory_space<vmem>>) attributes {dimension_semantics = [#tpu.dimension_semantics<parallel>, #tpu.dimension_semantics<arbitrary>], iteration_bounds = array<i64: 2, 1>, scalar_prefetch = 0 : i64, scratch_operands = 1 : i64, tpu.core_type = #tpu.core_type<tc>, window_params = [{transform_indices = @transform_0, window_bounds = array<i64: 8, 128>}, {transform_indices = @transform_1, window_bounds = array<i64: 128, 256>}, {transform_indices = @transform_2, window_bounds = array<i64: 1, 256>}, {transform_indices = @transform_3, window_bounds = array<i64: 256, 128>}, {pipeline_mode = #tpu.pipeline_mode<synchronous>, transform_indices = @transform_4, window_bounds = array<i64: 1, 128>}, {pipeline_mode = #tpu.pipeline_mode<synchronous>, transform_indices = @transform_5, window_bounds = array<i64: 1, 128>}, {pipeline_mode = #tpu.pipeline_mode<synchronous>, transform_indices = @transform_6, window_bounds = array<i64: 1, 128>}, {transform_indices = @transform_7, window_bounds = array<i64: 8, 128>}]} {
    %c0 = arith.constant 0 : index
    %c0_0 = arith.constant 0 : index
    %0 = vector.load %arg2[%c0, %c0_0] : memref<8x128xf32, #tpu.memory_space<vmem>>, vector<8x128xf32>
    %c0_i32 = arith.constant 0 : i32
    %1 = arith.cmpi eq, %arg1, %c0_i32 : i32
    %2 = arith.extui %1 : i1 to i32
    %c0_i32_1 = arith.constant 0 : i32
    %3 = arith.cmpi ne, %2, %c0_i32_1 : i32
    scf.if %3 {
      %c0_16 = arith.constant 0 : index
      %c0_17 = arith.constant 0 : index
      %19 = vector.load %arg6[%c0_16, %c0_17] : memref<1x128xf32, #tpu.memory_space<vmem>>, vector<1x128xf32>
      %20 = vector.broadcast %19 : vector<1x128xf32> to vector<8x128xf32>
      %21 = arith.addf %0, %20 : vector<8x128xf32>
      %c0_18 = arith.constant 0 : index
      %c0_19 = arith.constant 0 : index
      %22 = vector.load %arg10[%c0_18, %c0_19] : memref<8x128xf32, #tpu.memory_space<vmem>>, vector<8x128xf32>
      tpu.vector_store %arg10[%c0_18, %c0_19], %21 {strides = array<i32>} : memref<8x128xf32, #tpu.memory_space<vmem>>, vector<8x128xf32>,
    } else {
    }
    %c0_2 = arith.constant 0 : index
    %c0_3 = arith.constant 0 : index
    %4 = vector.load %arg3[%c0_2, %c0_3] : memref<128x256xf32, #tpu.memory_space<vmem>>, vector<128x256xf32>
    %cst = arith.constant dense<0.000000e+00> : vector<8x256xf32>
    %5 = tpu.matmul %0, %4, %cst {dimension_numbers = #tpu.dot_dimension_numbers<[1], [0], [0], [1], [0, 0, 1, 1], [], []>} : vector<8x128xf32>, vector<128x256xf32>, vector<8x256xf32> -> vector<8x256xf32>
    %c0_4 = arith.constant 0 : index
    %c0_5 = arith.constant 0 : index
    %6 = vector.load %arg4[%c0_4, %c0_5] : memref<1x256xf32, #tpu.memory_space<vmem>>, vector<1x256xf32>
    %7 = vector.broadcast %6 : vector<1x256xf32> to vector<8x256xf32>
    %8 = arith.addf %5, %7 : vector<8x256xf32>
    %cst_6 = arith.constant 0.000000e+00 : f32
    %9 = vector.broadcast %cst_6 : f32 to vector<8x256xf32>
    %10 = arith.maximumf %8, %9 : vector<8x256xf32>
    %c0_7 = arith.constant 0 : index
    %c0_8 = arith.constant 0 : index
    %11 = vector.load %arg10[%c0_7, %c0_8] : memref<8x128xf32, #tpu.memory_space<vmem>>, vector<8x128xf32>
    %c0_9 = arith.constant 0 : index
    %c0_10 = arith.constant 0 : index
    %12 = vector.load %arg5[%c0_9, %c0_10] : memref<256x128xf32, #tpu.memory_space<vmem>>, vector<256x128xf32>
    %cst_11 = arith.constant dense<0.000000e+00> : vector<8x128xf32>
    %13 = tpu.matmul %10, %12, %cst_11 {dimension_numbers = #tpu.dot_dimension_numbers<[1], [0], [0], [1], [0, 0, 1, 1], [], []>} : vector<8x256xf32>, vector<256x128xf32>, vector<8x128xf32> -> vector<8x128xf32>
    %14 = arith.addf %11, %13 : vector<8x128xf32>
    %c0_12 = arith.constant 0 : index
    %c0_13 = arith.constant 0 : index
    %15 = vector.load %arg10[%c0_12, %c0_13] : memref<8x128xf32, #tpu.memory_space<vmem>>, vector<8x128xf32>
    tpu.vector_store %arg10[%c0_12, %c0_13], %14 {strides = array<i32>} : memref<8x128xf32, #tpu.memory_space<vmem>>, vector<8x128xf32>,
    %c0_i32_14 = arith.constant 0 : i32
    %16 = arith.cmpi eq, %arg1, %c0_i32_14 : i32
    %17 = arith.extui %16 : i1 to i32
    %c0_i32_15 = arith.constant 0 : i32
    %18 = arith.cmpi ne, %17, %c0_i32_15 : i32
    scf.if %18 {
      %c0_16 = arith.constant 0 : index
      %c0_17 = arith.constant 0 : index
      %19 = vector.load %arg10[%c0_16, %c0_17] : memref<8x128xf32, #tpu.memory_space<vmem>>, vector<8x128xf32>
      %cst_18 = arith.constant dense<0.000000e+00> : vector<8xf32>
      %20 = vector.multi_reduction <add>, %19, %cst_18 [1] : vector<8x128xf32> to vector<8xf32>
      %21 = vector.shape_cast %20 : vector<8xf32> to vector<8x1xf32>
      %22 = arith.mulf %19, %19 : vector<8x128xf32>
      %cst_19 = arith.constant dense<0.000000e+00> : vector<8xf32>
      %23 = vector.multi_reduction <add>, %22, %cst_19 [1] : vector<8x128xf32> to vector<8xf32>
      %24 = vector.shape_cast %23 : vector<8xf32> to vector<8x1xf32>
      %cst_20 = arith.constant 7.812500e-03 : f32
      %25 = vector.broadcast %cst_20 : f32 to vector<8x1xf32>
      %26 = arith.mulf %21, %25 : vector<8x1xf32>
      %cst_21 = arith.constant 7.812500e-03 : f32
      %27 = vector.broadcast %cst_21 : f32 to vector<8x1xf32>
      %28 = arith.mulf %24, %27 : vector<8x1xf32>
      %29 = arith.mulf %26, %26 : vector<8x1xf32>
      %30 = arith.subf %28, %29 : vector<8x1xf32>
      %cst_22 = arith.constant 9.99999974E-6 : f32
      %31 = vector.broadcast %cst_22 : f32 to vector<8x1xf32>
      %32 = arith.addf %30, %31 : vector<8x1xf32>
      %33 = math.rsqrt %32 : vector<8x1xf32>
      %34 = vector.broadcast %26 : vector<8x1xf32> to vector<8x128xf32>
      %35 = arith.subf %19, %34 : vector<8x128xf32>
      %36 = vector.broadcast %33 : vector<8x1xf32> to vector<8x128xf32>
      %37 = arith.mulf %35, %36 : vector<8x128xf32>
      %c0_23 = arith.constant 0 : index
      %c0_24 = arith.constant 0 : index
      %38 = vector.load %arg7[%c0_23, %c0_24] : memref<1x128xf32, #tpu.memory_space<vmem>>, vector<1x128xf32>
      %39 = vector.broadcast %38 : vector<1x128xf32> to vector<8x128xf32>
      %40 = arith.mulf %37, %39 : vector<8x128xf32>
      %c0_25 = arith.constant 0 : index
      %c0_26 = arith.constant 0 : index
      %41 = vector.load %arg8[%c0_25, %c0_26] : memref<1x128xf32, #tpu.memory_space<vmem>>, vector<1x128xf32>
      %42 = vector.broadcast %41 : vector<1x128xf32> to vector<8x128xf32>
      %43 = arith.addf %40, %42 : vector<8x128xf32>
      %c0_27 = arith.constant 0 : index
      %c0_28 = arith.constant 0 : index
      %44 = vector.load %arg9[%c0_27, %c0_28] : memref<8x128xf32, #tpu.memory_space<vmem>>, vector<8x128xf32>
      tpu.vector_store %arg9[%c0_27, %c0_28], %43 {strides = array<i32>} : memref<8x128xf32, #tpu.memory_space<vmem>>, vector<8x128xf32>,
    } else {
    }
    return
  }
  func.func @transform_0(%arg0: i32, %arg1: i32) -> (i32, i32) {
    %c0_i32 = arith.constant 0 : i32
    %c0_i32_0 = arith.constant 0 : i32
    return %arg0, %c0_i32 : i32, i32
  }
  func.func @transform_1(%arg0: i32, %arg1: i32) -> (i32, i32) {
    %c0_i32 = arith.constant 0 : i32
    %c0_i32_0 = arith.constant 0 : i32
    return %c0_i32, %arg1 : i32, i32
  }
  func.func @transform_2(%arg0: i32, %arg1: i32) -> (i32, i32) {
    %c0_i32 = arith.constant 0 : i32
    %c0_i32_0 = arith.constant 0 : i32
    return %c0_i32, %arg1 : i32, i32
  }
  func.func @transform_3(%arg0: i32, %arg1: i32) -> (i32, i32) {
    %c0_i32 = arith.constant 0 : i32
    %c0_i32_0 = arith.constant 0 : i32
    return %arg1, %c0_i32 : i32, i32
  }
  func.func @transform_4(%arg0: i32, %arg1: i32) -> (i32, i32) {
    %c0_i32 = arith.constant 0 : i32
    %c0_i32_0 = arith.constant 0 : i32
    %c0_i32_1 = arith.constant 0 : i32
    return %c0_i32, %c0_i32_0 : i32, i32
  }
  func.func @transform_5(%arg0: i32, %arg1: i32) -> (i32, i32) {
    %c0_i32 = arith.constant 0 : i32
    %c0_i32_0 = arith.constant 0 : i32
    %c0_i32_1 = arith.constant 0 : i32
    return %c0_i32, %c0_i32_0 : i32, i32
  }
  func.func @transform_6(%arg0: i32, %arg1: i32) -> (i32, i32) {
    %c0_i32 = arith.constant 0 : i32
    %c0_i32_0 = arith.constant 0 : i32
    %c0_i32_1 = arith.constant 0 : i32
    return %c0_i32, %c0_i32_0 : i32, i32
  }
  func.func @transform_7(%arg0: i32, %arg1: i32) -> (i32, i32) {
    %c0_i32 = arith.constant 0 : i32
    %c0_i32_0 = arith.constant 0 : i32
    return %arg0, %c0_i32 : i32, i32
  }
}

</mosaic_0001>

<llo_original>
// kernel: tpu_custom_call.1
$region0: #{tpu_custom_call.1}
  #allocation0 [shape = 'u32[]', space=smem, size = 0x4, offset = 0x4, fixed_abs, tag = 'smem constant byte address 0x4 - core index']
  #allocation1 [shape = 'u32[144,128]{1,0:T(1,128)}', space=vmem, size = 0x12000, scoped, tag = 'internal scratch']
  #allocation2 [shape = 'f32[8,128]{1,0:T(8,128)}', space=vmem, size = 0x1000, scoped, tag = 'scratch operand']
  %s0 = inlined_call_operand.hbm [shape: f32[16,128], index: 0, kind: input, shape index: {}]
  %s1 = inlined_call_operand.hbm [shape: f32[128,256], index: 1, kind: input, shape index: {}]
  %s2 = inlined_call_operand.vmem [shape: f32[1,256], index: 2, kind: input, shape index: {}]
  %s3 = inlined_call_operand.hbm [shape: f32[256,128], index: 3, kind: input, shape index: {}]
  %s4 = inlined_call_operand.vmem [shape: f32[1,128], index: 4, kind: input, shape index: {}]
  %s5 = inlined_call_operand.vmem [shape: f32[1,128], index: 5, kind: input, shape index: {}]
  %s6 = inlined_call_operand.vmem [shape: f32[1,128], index: 6, kind: input, shape index: {}]
  %s7 = inlined_call_operand.hbm [shape: f32[16,128], index: 7, kind: output, shape index: {}]
  %s8 = sld [smem:[#allocation0]]
  $region81: #{tpu_custom_call.1} parent=0
    _
  %s10 = ssub.s32 1, %s8
  %s11 = scalar_select 0, %s10, %s8
  $region1: #{tpu_custom_call.1} parent=0
    #allocation3 [shape = 'u8[8192]{0}', space=vmem, size = 0x2000, scoped, tag = 'input window, operand 0']
    #allocation4 [shape = 's32[2]{0}', space=sflag, size = 0x8, scoped, tag = 'scoped memory for tpu_custom_call.1']
    #allocation5 [shape = 's32[2]{0}', space=sflag, size = 0x8, scoped, tag = 'scoped memory for tpu_custom_call.1']
    #allocation6 [shape = 'u8[131072]{0}', space=vmem, size = 0x20000, scoped, tag = 'input window, operand 1, single buffered']
    #allocation7 [shape = 's32[1]{0}', space=sflag, size = 0x4, scoped, tag = 'scoped memory for tpu_custom_call.1']
    #allocation8 [shape = 'u8[131072]{0}', space=vmem, size = 0x20000, scoped, tag = 'input window, operand 3, single buffered']
    #allocation9 [shape = 'u8[8192]{0}', space=vmem, size = 0x2000, scoped, tag = 'output window, operand 0']
    %12 = vsyncpa [#allocation4], 0
    %s13 = scalar_lea.sflag [#allocation4], 1
    %14 = vsyncpa %s13, 0
    %15 = vsyncpa [#allocation7], 0
    %16 = vsyncpa [#allocation5], 0
    %s17 = scalar_lea.sflag [#allocation5], 1
    %18 = vsyncpa %s17, 0
    loop: start=0, step=1, limit=4
    $region2: #{tpu_custom_call.1} parent=1 // loop_pre_header
      _
    $region3: #{tpu_custom_call.1} parent=1 // loop_header
      %s20 = sphi 0, %s24
      %p21 = scmp.ge.s32.totalorder %s20, 4
      %s27 = sphi 0, %s39
      %s28 = sphi 0, %s35
      %s29 = sphi 0, %s27
      %s30 = sphi 0, %s28
      %s31 = sphi 0, %s29
      %s32 = sphi 0, %s30
      %s42 = sphi 0, %s44
      %s45 = sphi 0, %s42
      %s46 = sphi 0, %s45
      %s62 = sphi 0, %s46
      %s68 = sphi 0, %s70
      %s71 = sphi 0, %s68
      %s72 = sphi 0, %s71
      %s88 = sphi 0, %s72
      %s94 = sphi 0, %s96
      %s97 = sphi 0, %s94
      %s98 = sphi 0, %s97
      %s114 = sphi 0, %s98
      %s120 = sphi 0, %s122
      %s123 = sphi 0, %s120
      %s124 = sphi 0, %s123
      %s140 = sphi 0, %s124
      %s144 = sphi 0, %s144
      %s146 = sphi 0, %s144
      %s147 = sphi 0, %s146
      %s161 = sphi 0, %s147
      %s165 = sphi 0, %s165
      %s167 = sphi 0, %s165
      %s168 = sphi 0, %s167
      %s182 = sphi 0, %s168
      %s186 = sphi 0, %s186
      %s188 = sphi 0, %s186
      %s189 = sphi 0, %s188
      %s203 = sphi 0, %s189
      %s209 = sphi 0, %s211
      %s212 = sphi 0, %s209
      %s213 = sphi 0, %s212
      %s229 = sphi 0, %s213
    $region4: #{tpu_custom_call.1} parent=1 // loop_header_branch
      %23 = sbr.rel (%p21) target = $region8
    $region5: #{tpu_custom_call.1} parent=1 // loop_body
      %s25 = ssub.s32 %s20, 1
      %s26 = ssub.s32 %s20, 2
      %s33 = sadd.s32 1, %s28
      %p34 = scmp.ge.s32.totalorder %s33, 1
      %s35 = scalar_select %p34, 0, %s33
      %s36 = sadd.s32 1, %s27
      %s37 = scalar_select %p34, %s36, %s27
      %p38 = scmp.ge.s32.totalorder %s37, 2
      %s39 = scalar_select %p38, 0, %s37
      %s40 = ssub.s32 %s27, %s39
      %p41 = scmp.eq.s32.totalorder %s40, 0
      %s43 = sadd.s32 %s42, 1
      %s44 = scalar_select %p41, %s42, %s43
      %p47 = pneg %p41
      %p48 = scmp.eq.s32.totalorder %s20, 1
      %p49 = por %p47, %p48
      %p50 = scmp.ne.s32.totalorder %s42, %s45
      %p51 = scmp.eq.s32.totalorder %s20, 0
      %p52 = por %p50, %p51
      %p53 = scmp.ne.s32.totalorder %s42, %s45
      %p54 = scmp.eq.s32.totalorder %s25, 1
      %p55 = por %p53, %p54
      %p56 = scmp.ne.s32.totalorder %s45, %s46
      %p57 = scmp.eq.s32.totalorder %s25, 0
      %p58 = por %p56, %p57
      %p59 = scmp.ne.s32.totalorder %s45, %s46
      %p60 = scmp.eq.s32.totalorder %s26, 1
      %p61 = por %p59, %p60
      %p63 = scmp.ne.s32.totalorder %s46, %s62
      %p64 = scmp.eq.s32.totalorder %s26, 0
      %p65 = por %p63, %p64
      %s66 = ssub.s32 %s28, %s35
      %p67 = scmp.eq.s32.totalorder %s66, 0
      %s69 = sadd.s32 %s68, 1
      %s70 = scalar_select %p67, %s68, %s69
      %p73 = pneg %p67
      %p74 = scmp.eq.s32.totalorder %s20, 1
      %p75 = por %p73, %p74
      %p76 = scmp.ne.s32.totalorder %s68, %s71
      %p77 = scmp.eq.s32.totalorder %s20, 0
      %p78 = por %p76, %p77
      %p79 = scmp.ne.s32.totalorder %s68, %s71
      %p80 = scmp.eq.s32.totalorder %s25, 1
      %p81 = por %p79, %p80
      %p82 = scmp.ne.s32.totalorder %s71, %s72
      %p83 = scmp.eq.s32.totalorder %s25, 0
      %p84 = por %p82, %p83
      %p85 = scmp.ne.s32.totalorder %s71, %s72
      %p86 = scmp.eq.s32.totalorder %s26, 1
      %p87 = por %p85, %p86
      %p89 = scmp.ne.s32.totalorder %s72, %s88
      %p90 = scmp.eq.s32.totalorder %s26, 0
      %p91 = por %p89, %p90
      %s92 = ssub.s32 %s28, %s35
      %p93 = scmp.eq.s32.totalorder %s92, 0
      %s95 = sadd.s32 %s94, 1
      %s96 = scalar_select %p93, %s94, %s95
      %p99 = pneg %p93
      %p100 = scmp.eq.s32.totalorder %s20, 1
      %p101 = por %p99, %p100
      %p102 = scmp.ne.s32.totalorder %s94, %s97
      %p103 = scmp.eq.s32.totalorder %s20, 0
      %p104 = por %p102, %p103
      %p105 = scmp.ne.s32.totalorder %s94, %s97
      %p106 = scmp.eq.s32.totalorder %s25, 1
      %p107 = por %p105, %p106
      %p108 = scmp.ne.s32.totalorder %s97, %s98
      %p109 = scmp.eq.s32.totalorder %s25, 0
      %p110 = por %p108, %p109
      %p111 = scmp.ne.s32.totalorder %s97, %s98
      %p112 = scmp.eq.s32.totalorder %s26, 1
      %p113 = por %p111, %p112
      %p115 = scmp.ne.s32.totalorder %s98, %s114
      %p116 = scmp.eq.s32.totalorder %s26, 0
      %p117 = por %p115, %p116
      %s118 = ssub.s32 %s28, %s35
      %p119 = scmp.eq.s32.totalorder %s118, 0
      %s121 = sadd.s32 %s120, 1
      %s122 = scalar_select %p119, %s120, %s121
      %p125 = pneg %p119
      %p126 = scmp.eq.s32.totalorder %s20, 1
      %p127 = por %p125, %p126
      %p128 = scmp.ne.s32.totalorder %s120, %s123
      %p129 = scmp.eq.s32.totalorder %s20, 0
      %p130 = por %p128, %p129
      %p131 = scmp.ne.s32.totalorder %s120, %s123
      %p132 = scmp.eq.s32.totalorder %s25, 1
      %p133 = por %p131, %p132
      %p134 = scmp.ne.s32.totalorder %s123, %s124
      %p135 = scmp.eq.s32.totalorder %s25, 0
      %p136 = por %p134, %p135
      %p137 = scmp.ne.s32.totalorder %s123, %s124
      %p138 = scmp.eq.s32.totalorder %s26, 1
      %p139 = por %p137, %p138
      %p141 = scmp.ne.s32.totalorder %s124, %s140
      %p142 = scmp.eq.s32.totalorder %s26, 0
      %p143 = por %p141, %p142
      %s145 = sadd.s32 %s144, 1
      %p148 = scmp.eq.s32.totalorder %s20, 1
      %p149 = scmp.ne.s32.totalorder %s144, %s146
      %p150 = scmp.eq.s32.totalorder %s20, 0
      %p151 = por %p149, %p150
      %p152 = scmp.ne.s32.totalorder %s144, %s146
      %p153 = scmp.eq.s32.totalorder %s25, 1
      %p154 = por %p152, %p153
      %p155 = scmp.ne.s32.totalorder %s146, %s147
      %p156 = scmp.eq.s32.totalorder %s25, 0
      %p157 = por %p155, %p156
      %p158 = scmp.ne.s32.totalorder %s146, %s147
      %p159 = scmp.eq.s32.totalorder %s26, 1
      %p160 = por %p158, %p159
      %p162 = scmp.ne.s32.totalorder %s147, %s161
      %p163 = scmp.eq.s32.totalorder %s26, 0
      %p164 = por %p162, %p163
      %s166 = sadd.s32 %s165, 1
      %p169 = scmp.eq.s32.totalorder %s20, 1
      %p170 = scmp.ne.s32.totalorder %s165, %s167
      %p171 = scmp.eq.s32.totalorder %s20, 0
      %p172 = por %p170, %p171
      %p173 = scmp.ne.s32.totalorder %s165, %s167
      %p174 = scmp.eq.s32.totalorder %s25, 1
      %p175 = por %p173, %p174
      %p176 = scmp.ne.s32.totalorder %s167, %s168
      %p177 = scmp.eq.s32.totalorder %s25, 0
      %p178 = por %p176, %p177
      %p179 = scmp.ne.s32.totalorder %s167, %s168
      %p180 = scmp.eq.s32.totalorder %s26, 1
      %p181 = por %p179, %p180
      %p183 = scmp.ne.s32.totalorder %s168, %s182
      %p184 = scmp.eq.s32.totalorder %s26, 0
      %p185 = por %p183, %p184
      %s187 = sadd.s32 %s186, 1
      %p190 = scmp.eq.s32.totalorder %s20, 1
      %p191 = scmp.ne.s32.totalorder %s186, %s188
      %p192 = scmp.eq.s32.totalorder %s20, 0
      %p193 = por %p191, %p192
      %p194 = scmp.ne.s32.totalorder %s186, %s188
      %p195 = scmp.eq.s32.totalorder %s25, 1
      %p196 = por %p194, %p195
      %p197 = scmp.ne.s32.totalorder %s188, %s189
      %p198 = scmp.eq.s32.totalorder %s25, 0
      %p199 = por %p197, %p198
      %p200 = scmp.ne.s32.totalorder %s188, %s189
      %p201 = scmp.eq.s32.totalorder %s26, 1
      %p202 = por %p200, %p201
      %p204 = scmp.ne.s32.totalorder %s189, %s203
      %p205 = scmp.eq.s32.totalorder %s26, 0
      %p206 = por %p204, %p205
      %s207 = ssub.s32 %s27, %s39
      %p208 = scmp.eq.s32.totalorder %s207, 0
      %s210 = sadd.s32 %s209, 1
      %s211 = scalar_select %p208, %s209, %s210
      %p214 = pneg %p208
      %p215 = scmp.eq.s32.totalorder %s20, 1
      %p216 = por %p214, %p215
      %p217 = scmp.ne.s32.totalorder %s209, %s212
      %p218 = scmp.eq.s32.totalorder %s20, 0
      %p219 = por %p217, %p218
      %p220 = scmp.ne.s32.totalorder %s209, %s212
      %p221 = scmp.eq.s32.totalorder %s25, 1
      %p222 = por %p220, %p221
      %p223 = scmp.ne.s32.totalorder %s212, %s213
      %p224 = scmp.eq.s32.totalorder %s25, 0
      %p225 = por %p223, %p224
      %p226 = scmp.ne.s32.totalorder %s212, %s213
      %p227 = scmp.eq.s32.totalorder %s26, 1
      %p228 = por %p226, %p227
      %p230 = scmp.ne.s32.totalorder %s213, %s229
      %p231 = scmp.eq.s32.totalorder %s26, 0
      %p232 = por %p230, %p231
      %p233 = scmp.le.s32.totalorder 1, %s20
      %p234 = scmp.lt.s32.totalorder %s20, 3
      %p235 = pnand %p233, %p234
      %p236 = pneg %p235
      // Predicated region
      $region9: #{tpu_custom_call.1} parent=5 // pred_check
        _
      $region10: #{tpu_custom_call.1} parent=5 // pred_check_branch
        %238 = sbr.rel (%p235) target = $region12
      $region11: #{tpu_custom_call.1} parent=5 // pred_region
        %s239 = ssub.s32 %s20, 1
        // Predicated region
        $region13: #{tpu_custom_call.1} parent=11 // pred_check
          %p240 = pneg %p84
        $region14: #{tpu_custom_call.1} parent=11 // pred_check_branch
          %242 = sbr.rel (%p240) target = $region16
        $region15: #{tpu_custom_call.1} parent=11 // pred_region
          %s243 = smul.u32 2, %s30
          %s245 = ssub.s32 4096, 4096
          %246 = vsyncadd [#allocation7], %s245
          %s247 = smul.addr %s243, 128
          %s248 = scalar_lea.hbm %s1, %s247
          %s249 = sshll.u32 [#allocation6], 4
          %s250 = int_to_ptr.vmem [resolvable:$true] %s249
          %255 = dma.hbm_to_vmem [thread:$0]  %s248, 4096, %s250, [#allocation7], 256, 256, 16
        $region16: #{tpu_custom_call.1} parent=11 // pred_fallthru
          _
        // Predicated region
        $region17: #{tpu_custom_call.1} parent=11 // pred_check
          %p256 = pneg %p110
        $region18: #{tpu_custom_call.1} parent=11 // pred_check_branch
          %258 = sbr.rel (%p256) target = $region20
        $region19: #{tpu_custom_call.1} parent=11 // pred_region
          %s259 = smul.u32 2, %s30
          %p260 = scmp.lt.s32.totalorder %s259, 1
          %s261 = scalar_select %p260, %s259, 1
          %s262 = scalar_lea.vmem %s2, %s261
          %s263 = smul.u32 2, %s30
        $region20: #{tpu_custom_call.1} parent=11 // pred_fallthru
          _
        // Predicated region
        $region21: #{tpu_custom_call.1} parent=11 // pred_check
          %p264 = pneg %p136
        $region22: #{tpu_custom_call.1} parent=11 // pred_check_branch
          %266 = sbr.rel (%p264) target = $region24
        $region23: #{tpu_custom_call.1} parent=11 // pred_region
          %s267 = smul.u32 32, %s30
          %s269 = ssub.s32 4096, 4096
          %270 = vsyncadd [#allocation7], %s269
          %s271 = smul.addr %s267, 128
          %s272 = scalar_lea.hbm %s3, %s271
          %s273 = sshll.u32 [#allocation8], 4
          %s274 = int_to_ptr.vmem [resolvable:$true] %s273
          %279 = dma.hbm_to_vmem [thread:$0]  %s272, 4096, %s274, [#allocation7], 128, 128, 8
        $region24: #{tpu_custom_call.1} parent=11 // pred_fallthru
          _
        // Predicated region
        $region25: #{tpu_custom_call.1} parent=11 // pred_check
          %p280 = pneg %p157
        $region26: #{tpu_custom_call.1} parent=11 // pred_check_branch
          %282 = sbr.rel (%p280) target = $region28
        $region27: #{tpu_custom_call.1} parent=11 // pred_region
          _
        $region28: #{tpu_custom_call.1} parent=11 // pred_fallthru
          _
        // Predicated region
        $region29: #{tpu_custom_call.1} parent=11 // pred_check
          %p283 = pneg %p178
        $region30: #{tpu_custom_call.1} parent=11 // pred_check_branch
          %285 = sbr.rel (%p283) target = $region32
        $region31: #{tpu_custom_call.1} parent=11 // pred_region
          _
        $region32: #{tpu_custom_call.1} parent=11 // pred_fallthru
          _
        // Predicated region
        $region33: #{tpu_custom_call.1} parent=11 // pred_check
          %p286 = pneg %p199
        $region34: #{tpu_custom_call.1} parent=11 // pred_check_branch
          %288 = sbr.rel (%p286) target = $region36
        $region35: #{tpu_custom_call.1} parent=11 // pred_region
          _
        $region36: #{tpu_custom_call.1} parent=11 // pred_fallthru
          _
      $region12: #{tpu_custom_call.1} parent=5 // pred_fallthru
        _
      %p289 = scmp.lt.s32.totalorder %s20, 2
      // Predicated region
      $region37: #{tpu_custom_call.1} parent=5 // pred_check
        %p290 = pneg %p289
      $region38: #{tpu_custom_call.1} parent=5 // pred_check_branch
        %292 = sbr.rel (%p290) target = $region40
      $region39: #{tpu_custom_call.1} parent=5 // pred_region
        // Predicated region
        $region41: #{tpu_custom_call.1} parent=39 // pred_check
          %p293 = pneg %p52
        $region42: #{tpu_custom_call.1} parent=39 // pred_check_branch
          %295 = sbr.rel (%p293) target = $region44
        $region43: #{tpu_custom_call.1} parent=39 // pred_region
          %s296 = sand.u32 %s42, 1
          %s297 = scalar_lea.sflag [#allocation4], %s296
          %s298 = sand.u32 %s42, 1
          %s299 = smul.addr %s298, 8
          %s300 = scalar_lea.vmem [#allocation3], %s299
          %s302 = ssub.s32 128, 128
          %303 = vsyncadd %s297, %s302
          %s304 = smul.addr %s27, 128
          %s305 = scalar_lea.hbm %s0, %s304
          %s307 = sshll.u32 %s300, 4
          %s308 = int_to_ptr.vmem [resolvable:$true] %s307
          %310 = dma.hbm_to_vmem [thread:$0]  %s305, 128, %s308, %s297
        $region44: #{tpu_custom_call.1} parent=39 // pred_fallthru
          _
      $region40: #{tpu_custom_call.1} parent=5 // pred_fallthru
        _
      %p311 = scmp.le.s32.totalorder 1, %s20
      %p312 = scmp.lt.s32.totalorder %s20, 3
      %p313 = pnand %p311, %p312
      %p314 = pneg %p313
      // Predicated region
      $region45: #{tpu_custom_call.1} parent=5 // pred_check
        _
      $region46: #{tpu_custom_call.1} parent=5 // pred_check_branch
        %316 = sbr.rel (%p313) target = $region48
      $region47: #{tpu_custom_call.1} parent=5 // pred_region
        %s317 = ssub.s32 %s20, 1
        %s318 = sand.u32 %s45, 1
        %s319 = scalar_lea.sflag [#allocation4], %s318
        %s320 = sand.u32 %s45, 1
        %s321 = smul.addr %s320, 8
        %s322 = scalar_lea.vmem [#allocation3], %s321
        // Predicated region
        $region49: #{tpu_custom_call.1} parent=47 // pred_check
          %p323 = pneg %p58
        $region50: #{tpu_custom_call.1} parent=47 // pred_check_branch
          %325 = sbr.rel (%p323) target = $region52
        $region51: #{tpu_custom_call.1} parent=47 // pred_region
          %326 = dma.done %s319, 128
        $region52: #{tpu_custom_call.1} parent=47 // pred_fallthru
          _
        // Predicated region
        $region53: #{tpu_custom_call.1} parent=47 // pred_check
          %p327 = pneg %p84
        $region54: #{tpu_custom_call.1} parent=47 // pred_check_branch
          %329 = sbr.rel (%p327) target = $region56
        $region55: #{tpu_custom_call.1} parent=47 // pred_region
          %330 = dma.done [#allocation7], 4096
        $region56: #{tpu_custom_call.1} parent=47 // pred_fallthru
          _
        // Predicated region
        $region57: #{tpu_custom_call.1} parent=47 // pred_check
          %p331 = pneg %p136
        $region58: #{tpu_custom_call.1} parent=47 // pred_check_branch
          %333 = sbr.rel (%p331) target = $region60
        $region59: #{tpu_custom_call.1} parent=47 // pred_region
          %334 = dma.done [#allocation7], 4096
        $region60: #{tpu_custom_call.1} parent=47 // pred_fallthru
          _
        %s335 = sand.u32 %s45, 1
        %s336 = scalar_lea.sflag [#allocation4], %s335
        %s337 = sand.u32 %s45, 1
        %s338 = smul.addr %s337, 8
        %s339 = scalar_lea.vmem [#allocation3], %s338
        %p340 = pneg %p58
        %p341 = pneg %p55
        %p342 = pneg %p84
        %p343 = pneg %p81
        %s344 = smul.u32 2, %s30
        %p345 = scmp.lt.s32.totalorder %s344, 1
        %s346 = scalar_select %p345, %s344, 1
        %s347 = scalar_lea.vmem %s2, %s346
        %p348 = pneg %p110
        %p349 = pneg %p107
        %p350 = pneg %p136
        %p351 = pneg %p133
        %p352 = pneg %p157
        %p353 = pneg %p154
        %p354 = pneg %p178
        %p355 = pneg %p175
        %p356 = pneg %p199
        %p357 = pneg %p196
        %p358 = pneg %p225
        %p359 = pneg %p222
        %s360 = sand.u32 %s212, 1
        %s361 = scalar_lea.sflag [#allocation5], %s360
        %s362 = sand.u32 %s212, 1
        %s363 = smul.addr %s362, 8
        %s364 = scalar_lea.vmem [#allocation9], %s363
        %s365 = smul.u32 2, %s30
        %s366 = smul.u32 2, %s30
        %p367 = scmp.lt.s32.totalorder %s366, 1
        %s368 = scalar_select %p367, %s366, 1
        %s369 = scalar_lea.vmem %s2, %s368
        %s370 = smul.u32 2, %s30
        %s371 = smul.u32 32, %s30
        %v372 = vld [vmem:[%s322] sm:$0xff]
        %p373 = scmp.eq.s32.totalorder %s30, 0
        // Predicated region
        $region61: #{tpu_custom_call.1} parent=47 // pred_check
          %p374 = pneg %p373
        $region62: #{tpu_custom_call.1} parent=47 // pred_check_branch
          %376 = sbr.rel (%p374) target = $region64
        $region63: #{tpu_custom_call.1} parent=47 // pred_region
          %v377 = vld [vmem:[%s4] sm:$0x1]
          %v379 = vlaneseq
          %v380 = vshrl.u32 %v379, 7
          %v381 = vsub.s32 0, %v380
          %v382 = vrot.slane %v377, %v381
          %v384 = vadd.f32 %v372, %v382
          %385 = vst [vmem:[#allocation2] sm:$0xff] %v384
        $region64: #{tpu_custom_call.1} parent=47 // pred_fallthru
          _
        %v386 = vld [vmem:[#allocation6] sm:$0xff]
        %v387 = vld [vmem:[#allocation6 + $0x8] sm:$0xff]
        %v388 = vld [vmem:[#allocation6 + $0x10] sm:$0xff]
        %v389 = vld [vmem:[#allocation6 + $0x18] sm:$0xff]
        %v390 = vld [vmem:[#allocation6 + $0x20] sm:$0xff]
        %v391 = vld [vmem:[#allocation6 + $0x28] sm:$0xff]
        %v392 = vld [vmem:[#allocation6 + $0x30] sm:$0xff]
        %v393 = vld [vmem:[#allocation6 + $0x38] sm:$0xff]
        %v394 = vld [vmem:[#allocation6 + $0x40] sm:$0xff]
        %v395 = vld [vmem:[#allocation6 + $0x48] sm:$0xff]
        %v396 = vld [vmem:[#allocation6 + $0x50] sm:$0xff]
        %v397 = vld [vmem:[#allocation6 + $0x58] sm:$0xff]
        %v398 = vld [vmem:[#allocation6 + $0x60] sm:$0xff]
        %v399 = vld [vmem:[#allocation6 + $0x68] sm:$0xff]
        %v400 = vld [vmem:[#allocation6 + $0x70] sm:$0xff]
        %v401 = vld [vmem:[#allocation6 + $0x78] sm:$0xff]
        %v402 = vld [vmem:[#allocation6 + $0x80] sm:$0xff]
        %v403 = vld [vmem:[#allocation6 + $0x88] sm:$0xff]
        %v404 = vld [vmem:[#allocation6 + $0x90] sm:$0xff]
        %v405 = vld [vmem:[#allocation6 + $0x98] sm:$0xff]
        %v406 = vld [vmem:[#allocation6 + $0xa0] sm:$0xff]
        %v407 = vld [vmem:[#allocation6 + $0xa8] sm:$0xff]
        %v408 = vld [vmem:[#allocation6 + $0xb0] sm:$0xff]
        %v409 = vld [vmem:[#allocation6 + $0xb8] sm:$0xff]
        %v410 = vld [vmem:[#allocation6 + $0xc0] sm:$0xff]
        %v411 = vld [vmem:[#allocation6 + $0xc8] sm:$0xff]
        %v412 = vld [vmem:[#allocation6 + $0xd0] sm:$0xff]
        %v413 = vld [vmem:[#allocation6 + $0xd8] sm:$0xff]
        %v414 = vld [vmem:[#allocation6 + $0xe0] sm:$0xff]
        %v415 = vld [vmem:[#allocation6 + $0xe8] sm:$0xff]
        %v416 = vld [vmem:[#allocation6 + $0xf0] sm:$0xff]
        %v417 = vld [vmem:[#allocation6 + $0xf8] sm:$0xff]
        %v418 = vld [vmem:[%s369] sm:$0x3]
        %v420 = vlaneseq
        %v421 = vshrl.u32 %v420, 7
        %v422 = vsub.s32 0, %v421
        %v423 = vrot.slane %v418, %v422
        %v424 = vlaneseq
        %v425 = vshrl.u32 %v424, 7
        %v426 = vsub.s32 1, %v425
        %v427 = vrot.slane %v418, %v426
        %430 = vmatprep.subr.mxu0 %v387
        %431 = vmatpush1.msra.mxu0 %v386
        %432 = vmatprep.subr.mxu0 %v389
        %433 = vmatpush1.msra.mxu0 %v388
        %434 = vmatprep.subr.mxu0 %v391
        %435 = vmatpush1.msra.mxu0 %v390
        %436 = vmatprep.subr.mxu0 %v393
        %437 = vmatpush1.msra.mxu0 %v392
        %438 = vmatprep.subr.mxu0 %v395
        %439 = vmatpush1.msra.mxu0 %v394
        %440 = vmatprep.subr.mxu0 %v397
        %441 = vmatpush1.msra.mxu0 %v396
        %442 = vmatprep.subr.mxu0 %v399
        %443 = vmatpush1.msra.mxu0 %v398
        %444 = vmatprep.subr.mxu0 %v401
        %445 = vmatpush1.msra.mxu0 %v400
        %446 = vmatprep.subr.mxu0 %v403
        %447 = vmatpush1.msra.mxu0 %v402
        %448 = vmatprep.subr.mxu0 %v405
        %449 = vmatpush1.msra.mxu0 %v404
        %450 = vmatprep.subr.mxu0 %v407
        %451 = vmatpush1.msra.mxu0 %v406
        %452 = vmatprep.subr.mxu0 %v409
        %453 = vmatpush1.msra.mxu0 %v408
        %454 = vmatprep.subr.mxu0 %v411
        %455 = vmatpush1.msra.mxu0 %v410
        %456 = vmatprep.subr.mxu0 %v413
        %457 = vmatpush1.msra.mxu0 %v412
        %458 = vmatprep.subr.mxu0 %v415
        %459 = vmatpush1.msra.mxu0 %v414
        %460 = vmatprep.subr.mxu0 %v417
        %461 = vmatpush1.msra.mxu0 %v416
        %462 = vmatprep.subr.mxu0 0.0
        %463 = vmatpush1.msra.mxu0 0.0
        %464 = vmatprep.subr.mxu0 0.0
        %465 = vmatpush1.msra.mxu0 0.0
        %466 = vmatprep.subr.mxu0 0.0
        %467 = vmatpush1.msra.mxu0 0.0
        %468 = vmatprep.subr.mxu0 0.0
        %469 = vmatpush1.msra.mxu0 0.0
        %470 = vmatprep.subr.mxu0 0.0
        %471 = vmatpush1.msra.mxu0 0.0
        %472 = vmatprep.subr.mxu0 0.0
        %473 = vmatpush1.msra.mxu0 0.0
        %474 = vmatprep.subr.mxu0 0.0
        %475 = vmatpush1.msra.mxu0 0.0
        %476 = vmatprep.subr.mxu0 0.0
        %477 = vmatpush1.msra.mxu0 0.0
        %478 = vmatprep.subr.mxu0 0.0
        %479 = vmatpush1.msra.mxu0 0.0
        %480 = vmatprep.subr.mxu0 0.0
        %481 = vmatpush1.msra.mxu0 0.0
        %482 = vmatprep.subr.mxu0 0.0
        %483 = vmatpush1.msra.mxu0 0.0
        %484 = vmatprep.subr.mxu0 0.0
        %485 = vmatpush1.msra.mxu0 0.0
        %486 = vmatprep.subr.mxu0 0.0
        %487 = vmatpush1.msra.mxu0 0.0
        %488 = vmatprep.subr.mxu0 0.0
        %489 = vmatpush1.msra.mxu0 0.0
        %490 = vmatprep.subr.mxu0 0.0
        %491 = vmatpush1.msra.mxu0 0.0
        %492 = vmatprep.subr.mxu0 0.0
        %493 = vmatpush1.msra.mxu0 0.0
        %494 = vmatprep.mubr.f32.mxu0 0.0
        %495 = vmatmul.mubr.f32.gmra.mrb[0].mxu0 %v372
        %v496 = vpop.f32.mrb[0].mxu0
        %v497 = vadd.f32 %v423, %v496
        %v498 = vpop.f32.mrb[0].mxu0
        %v499 = vadd.f32 %v427, %v498
        %500 = vdwg.mxu0
        %v501 = vmax.f32 %v497, 0.0
        %v502 = vmax.f32 %v499, 0.0
        %v503 = vld [vmem:[#allocation2] sm:$0xff]
        %v504 = vld [vmem:[#allocation8] sm:$0xff]
        %v505 = vld [vmem:[#allocation8 + $0x8] sm:$0xff]
        %v506 = vld [vmem:[#allocation8 + $0x10] sm:$0xff]
        %v507 = vld [vmem:[#allocation8 + $0x18] sm:$0xff]
        %v508 = vld [vmem:[#allocation8 + $0x20] sm:$0xff]
        %v509 = vld [vmem:[#allocation8 + $0x28] sm:$0xff]
        %v510 = vld [vmem:[#allocation8 + $0x30] sm:$0xff]
        %v511 = vld [vmem:[#allocation8 + $0x38] sm:$0xff]
        %v512 = vld [vmem:[#allocation8 + $0x40] sm:$0xff]
        %v513 = vld [vmem:[#allocation8 + $0x48] sm:$0xff]
        %v514 = vld [vmem:[#allocation8 + $0x50] sm:$0xff]
        %v515 = vld [vmem:[#allocation8 + $0x58] sm:$0xff]
        %v516 = vld [vmem:[#allocation8 + $0x60] sm:$0xff]
        %v517 = vld [vmem:[#allocation8 + $0x68] sm:$0xff]
        %v518 = vld [vmem:[#allocation8 + $0x70] sm:$0xff]
        %v519 = vld [vmem:[#allocation8 + $0x78] sm:$0xff]
        %v520 = vld [vmem:[#allocation8 + $0x80] sm:$0xff]
        %v521 = vld [vmem:[#allocation8 + $0x88] sm:$0xff]
        %v522 = vld [vmem:[#allocation8 + $0x90] sm:$0xff]
        %v523 = vld [vmem:[#allocation8 + $0x98] sm:$0xff]
        %v524 = vld [vmem:[#allocation8 + $0xa0] sm:$0xff]
        %v525 = vld [vmem:[#allocation8 + $0xa8] sm:$0xff]
        %v526 = vld [vmem:[#allocation8 + $0xb0] sm:$0xff]
        %v527 = vld [vmem:[#allocation8 + $0xb8] sm:$0xff]
        %v528 = vld [vmem:[#allocation8 + $0xc0] sm:$0xff]
        %v529 = vld [vmem:[#allocation8 + $0xc8] sm:$0xff]
        %v530 = vld [vmem:[#allocation8 + $0xd0] sm:$0xff]
        %v531 = vld [vmem:[#allocation8 + $0xd8] sm:$0xff]
        %v532 = vld [vmem:[#allocation8 + $0xe0] sm:$0xff]
        %v533 = vld [vmem:[#allocation8 + $0xe8] sm:$0xff]
        %v534 = vld [vmem:[#allocation8 + $0xf0] sm:$0xff]
        %v535 = vld [vmem:[#allocation8 + $0xf8] sm:$0xff]
        %536 = vmatprep.subr.mxu0 0.0
        %537 = vmatpush1.msra.mxu0 %v504
        %538 = vmatprep.subr.mxu0 0.0
        %539 = vmatpush1.msra.mxu0 %v505
        %540 = vmatprep.subr.mxu0 0.0
        %541 = vmatpush1.msra.mxu0 %v506
        %542 = vmatprep.subr.mxu0 0.0
        %543 = vmatpush1.msra.mxu0 %v507
        %544 = vmatprep.subr.mxu0 0.0
        %545 = vmatpush1.msra.mxu0 %v508
        %546 = vmatprep.subr.mxu0 0.0
        %547 = vmatpush1.msra.mxu0 %v509
        %548 = vmatprep.subr.mxu0 0.0
        %549 = vmatpush1.msra.mxu0 %v510
        %550 = vmatprep.subr.mxu0 0.0
        %551 = vmatpush1.msra.mxu0 %v511
        %552 = vmatprep.subr.mxu0 0.0
        %553 = vmatpush1.msra.mxu0 %v512
        %554 = vmatprep.subr.mxu0 0.0
        %555 = vmatpush1.msra.mxu0 %v513
        %556 = vmatprep.subr.mxu0 0.0
        %557 = vmatpush1.msra.mxu0 %v514
        %558 = vmatprep.subr.mxu0 0.0
        %559 = vmatpush1.msra.mxu0 %v515
        %560 = vmatprep.subr.mxu0 0.0
        %561 = vmatpush1.msra.mxu0 %v516
        %562 = vmatprep.subr.mxu0 0.0
        %563 = vmatpush1.msra.mxu0 %v517
        %564 = vmatprep.subr.mxu0 0.0
        %565 = vmatpush1.msra.mxu0 %v518
        %566 = vmatprep.subr.mxu0 0.0
        %567 = vmatpush1.msra.mxu0 %v519
        %568 = vmatprep.subr.mxu0 0.0
        %569 = vmatpush1.msra.mxu0 %v520
        %570 = vmatprep.subr.mxu0 0.0
        %571 = vmatpush1.msra.mxu0 %v521
        %572 = vmatprep.subr.mxu0 0.0
        %573 = vmatpush1.msra.mxu0 %v522
        %574 = vmatprep.subr.mxu0 0.0
        %575 = vmatpush1.msra.mxu0 %v523
        %576 = vmatprep.subr.mxu0 0.0
        %577 = vmatpush1.msra.mxu0 %v524
        %578 = vmatprep.subr.mxu0 0.0
        %579 = vmatpush1.msra.mxu0 %v525
        %580 = vmatprep.subr.mxu0 0.0
        %581 = vmatpush1.msra.mxu0 %v526
        %582 = vmatprep.subr.mxu0 0.0
        %583 = vmatpush1.msra.mxu0 %v527
        %584 = vmatprep.subr.mxu0 0.0
        %585 = vmatpush1.msra.mxu0 %v528
        %586 = vmatprep.subr.mxu0 0.0
        %587 = vmatpush1.msra.mxu0 %v529
        %588 = vmatprep.subr.mxu0 0.0
        %589 = vmatpush1.msra.mxu0 %v530
        %590 = vmatprep.subr.mxu0 0.0
        %591 = vmatpush1.msra.mxu0 %v531
        %592 = vmatprep.subr.mxu0 0.0
        %593 = vmatpush1.msra.mxu0 %v532
        %594 = vmatprep.subr.mxu0 0.0
        %595 = vmatpush1.msra.mxu0 %v533
        %596 = vmatprep.subr.mxu0 0.0
        %597 = vmatpush1.msra.mxu0 %v534
        %598 = vmatprep.subr.mxu0 0.0
        %599 = vmatpush1.msra.mxu0 %v535
        %600 = vmatprep.mubr.f32.mxu0 %v502
        %601 = vmatmul.mubr.f32.gmra.mrb[0].mxu0 %v501
        %v602 = vpop.f32.mrb[0].mxu0
        %v603 = vadd.f32 0.0, %v602
        %v604 = vpop.f32.mrb[0].mxu0
        %605 = vdwg.mxu0
        %v606 = vadd.f32 %v503, %v603
        %607 = vst [vmem:[#allocation2] sm:$0xff] %v606
        // Predicated region
        $region65: #{tpu_custom_call.1} parent=47 // pred_check
          %p608 = pneg %p373
        $region66: #{tpu_custom_call.1} parent=47 // pred_check_branch
          %610 = sbr.rel (%p608) target = $region68
        $region67: #{tpu_custom_call.1} parent=47 // pred_region
          %v611 = vld [vmem:[#allocation2] sm:$0xff]
          %612 = vadd.xlane.f32.xlu0 %v611
          %v613 = vpop.xlane.xlu0 %612
          %v614 = vmul.f32 %v611, %v611
          %615 = vadd.xlane.f32.xlu0 %v614
          %v616 = vpop.xlane.xlu0 %615
          %v617 = vmul.f32 %v613, 0.0078125
          %v618 = vmul.f32 %v616, 0.0078125
          %v619 = vmul.f32 %v617, %v617
          %v620 = vsub.f32 %v618, %v619
          %v621 = vadd.f32 %v620, 1e-05
          %v622 = vrsqrt.pop %v621
          %v623 = vsub.f32 %v611, %v617
          %v624 = vmul.f32 %v623, %v622
          %v625 = vld [vmem:[%s5] sm:$0x1]
          %v627 = vlaneseq
          %v628 = vshrl.u32 %v627, 7
          %v629 = vsub.s32 0, %v628
          %v630 = vrot.slane %v625, %v629
          %v632 = vmul.f32 %v624, %v630
          %v633 = vld [vmem:[%s6] sm:$0x1]
          %v635 = vlaneseq
          %v636 = vshrl.u32 %v635, 7
          %v637 = vsub.s32 0, %v636
          %v638 = vrot.slane %v633, %v637
          %v640 = vadd.f32 %v632, %v638
          %641 = vst [vmem:[%s364] sm:$0xff] %v640
        $region68: #{tpu_custom_call.1} parent=47 // pred_fallthru
          _
        %s642 = sand.u32 %s212, 1
        %s643 = scalar_lea.sflag [#allocation5], %s642
        %s644 = sand.u32 %s212, 1
        %s645 = smul.addr %s644, 8
        %s646 = scalar_lea.vmem [#allocation9], %s645
        // Predicated region
        $region69: #{tpu_custom_call.1} parent=47 // pred_check
          %p647 = pneg %p222
        $region70: #{tpu_custom_call.1} parent=47 // pred_check_branch
          %649 = sbr.rel (%p647) target = $region72
        $region71: #{tpu_custom_call.1} parent=47 // pred_region
          %s651 = ssub.s32 128, 128
          %652 = vsyncadd %s643, %s651
          %s653 = smul.addr %s29, 128
          %s654 = scalar_lea.hbm %s7, %s653
          %s656 = sshll.u32 %s646, 4
          %s657 = int_to_ptr.vmem [resolvable:$true] %s656
          %659 = dma.vmem_to_hbm [thread:$0]  %s657, 128, %s654, %s643
        $region72: #{tpu_custom_call.1} parent=47 // pred_fallthru
          _
      $region48: #{tpu_custom_call.1} parent=5 // pred_fallthru
        _
      %p660 = scmp.le.s32.totalorder 2, %s20
      // Predicated region
      $region73: #{tpu_custom_call.1} parent=5 // pred_check
        %p661 = pneg %p660
      $region74: #{tpu_custom_call.1} parent=5 // pred_check_branch
        %663 = sbr.rel (%p661) target = $region76
      $region75: #{tpu_custom_call.1} parent=5 // pred_region
        %s664 = ssub.s32 %s20, 2
        // Predicated region
        $region77: #{tpu_custom_call.1} parent=75 // pred_check
          %p665 = pneg %p228
        $region78: #{tpu_custom_call.1} parent=75 // pred_check_branch
          %667 = sbr.rel (%p665) target = $region80
        $region79: #{tpu_custom_call.1} parent=75 // pred_region
          %s668 = sand.u32 %s213, 1
          %s669 = scalar_lea.sflag [#allocation5], %s668
          %s670 = sand.u32 %s213, 1
          %s671 = smul.addr %s670, 8
          %s672 = scalar_lea.vmem [#allocation9], %s671
          %673 = dma.done %s669, 128
        $region80: #{tpu_custom_call.1} parent=75 // pred_fallthru
          _
      $region76: #{tpu_custom_call.1} parent=5 // pred_fallthru
        _
    $region6: #{tpu_custom_call.1} parent=1 // loop_footer
      %s24 = sadd.s32 1, %s20
    $region7: #{tpu_custom_call.1} parent=1 // loop_footer_branch
      %19 = sbr.rel target = $region3
    $region8: #{tpu_custom_call.1} parent=1 // loop_exit
      _
    %674 = vsyncpa [#allocation4], 1
    %s675 = scalar_lea.sflag [#allocation4], 1
    %676 = vsyncpa %s675, 1
    %677 = vsyncpa [#allocation7], 1
    %678 = vsyncpa [#allocation5], 1
    %s679 = scalar_lea.sflag [#allocation5], 1
    %680 = vsyncpa %s679, 1

</llo_original>
